<compile_context>
chip_gen: v7x
topology: tpu7x:2x2x1
jax: 0.10.0
libtpu: 0.0.40
codegen_flags: <defaults>
</compile_context>

<pallas_src>
import functools

import jax
import jax.numpy as jnp
from jax.experimental import pallas as pl
from jax.experimental.pallas import tpu as pltpu

MAX_POSITIONS = 4096  # fixed in the reference module: nn.Embedding(4096, pos_dim)


# ----------------------------------------------------------------------------
# 'learn' path: table[:S] via a single direct HBM->HBM DMA (no VMEM staging)
# ----------------------------------------------------------------------------
def _table_slice_dma_kernel(table_ref, out_ref, sem, *, seq_len):
    # table_ref / out_ref live in pl.ANY (HBM). seq_len is static, so the
    # slice is a single contiguous region -> one DMA descriptor.
    cp = pltpu.make_async_copy(
        table_ref.at[pl.ds(0, seq_len), :], out_ref, sem
    )
    cp.start()
    cp.wait()


def learned_pos_embedding(table, seq_len):
    """Copy table[:seq_len] -> (1, seq_len, pos_dim) with one HBM->HBM DMA."""
    n_rows, pos_dim = table.shape
    if seq_len > n_rows:
        raise ValueError(f"sequence length {seq_len} exceeds table size {n_rows}")

    out = pl.pallas_call(
        functools.partial(_table_slice_dma_kernel, seq_len=seq_len),
        out_shape=jax.ShapeDtypeStruct((seq_len, pos_dim), table.dtype),
        in_specs=[pl.BlockSpec(memory_space=pl.ANY)],   # raw HBM ref, no auto-DMA
        out_specs=pl.BlockSpec(memory_space=pl.ANY),    # write target stays in HBM
        scratch_shapes=[pltpu.SemaphoreType.DMA(())],
    )(table)
    return out[None]  # (1, S, pos_dim), matching nn.Embedding on (1, S) ids


# ----------------------------------------------------------------------------
# Module wrapper mirroring the PyTorch class
# ----------------------------------------------------------------------------
class AbsPositionEmbedding:
    def __init__(self, pos_config):
        self.pos_config = pos_config
        self.pos_dim = pos_config["rnn_dim"]
        mode = pos_config["pos_embed"]
        if mode == "none":
            pass
        elif mode == "learn":
            # nn.Embedding(4096, pos_dim) default init ~ N(0, 1), deterministic here.
            key = jax.random.PRNGKey(0)
            self.table = jax.random.normal(
                key, (MAX_POSITIONS, self.pos_dim), dtype=jnp.float32
            )
        else:
            # TODO(synk): 'axial' and 'tri' position embeddings not implemented.
            raise NotImplementedError(mode)

    def __call__(self, x):
        mode = self.pos_config["pos_embed"]
        if mode == "none":
            # Per perf review: a broadcast-constant zeros fuses into the
            # consumer with zero HBM traffic; a Pallas kernel would only add
            # a wasted full B*S*D HBM write + re-read.
            return jnp.zeros_like(x)
        elif mode == "learn":
            seq_len = x.shape[1]
            if seq_len > MAX_POSITIONS:
                raise ValueError(
                    f"sequence length {seq_len} exceeds {MAX_POSITIONS}"
                )
            return learned_pos_embedding(self.table, seq_len)
        else:
            raise NotImplementedError(mode)


# ----------------------------------------------------------------------------
if __name__ == "__main__":
    B, S, D = 2, 8, 128  # small shapes; D = rnn_dim (lane-aligned)
    x = jax.random.normal(jax.random.PRNGKey(0), (B, S, D), dtype=jnp.float32)

    # 'learn' path (Pallas single-DMA kernel)
    mod_learn = AbsPositionEmbedding({"pos_embed": "learn", "rnn_dim": D})
    out_learn = mod_learn(x)
    jax.block_until_ready(out_learn)
    assert out_learn.shape == (1, S, D)
    ref_learn = mod_learn.table[:S][None]  # arange ids -> plain slice
    assert jnp.allclose(out_learn, ref_learn), "learn-path mismatch"

    # 'none' path (broadcast constant; no kernel by design)
    mod_none = AbsPositionEmbedding({"pos_embed": "none", "rnn_dim": D})
    out_none = mod_none(x)
    jax.block_until_ready(out_none)
    assert out_none.shape == x.shape and out_none.dtype == x.dtype
    assert bool(jnp.all(out_none == 0)), "none-path mismatch"

    print("KERNEL_OK")
</pallas_src>

<mosaic_0001>
module attributes {stable_mosaic.version = 11 : i64} {
  func.func @_table_slice_dma_kernel(%arg0: memref<4096x128xf32, #tpu.memory_space<any>>, %arg1: memref<8x128xf32, #tpu.memory_space<any>>, %arg2: memref<!tpu.dma_semaphore, #tpu.memory_space<semaphore_mem>>) attributes {dimension_semantics = [], scalar_prefetch = 0 : i64, scratch_operands = 1 : i64, tpu.core_type = #tpu.core_type<tc>} {
    %c0_i32 = arith.constant 0 : i32
    %c0_i32_0 = arith.constant 0 : i32
    %0 = tpu.memref_slice %arg0[%c0_i32, %c0_i32_0] : memref<4096x128xf32, #tpu.memory_space<any>> -> memref<8x128xf32, #tpu.memory_space<any>>
    tpu.enqueue_dma source(%0 : memref<8x128xf32, #tpu.memory_space<any>>) target(%arg1 : memref<8x128xf32, #tpu.memory_space<any>>) target_semaphore(%arg2 : memref<!tpu.dma_semaphore, #tpu.memory_space<semaphore_mem>>)
    %c0_i32_1 = arith.constant 0 : i32
    %c0_i32_2 = arith.constant 0 : i32
    %1 = tpu.memref_slice %arg0[%c0_i32_1, %c0_i32_2] : memref<4096x128xf32, #tpu.memory_space<any>> -> memref<8x128xf32, #tpu.memory_space<any>>
    tpu.wait_dma2 semaphore(%arg2 : memref<!tpu.dma_semaphore, #tpu.memory_space<semaphore_mem>>) src(%1 : memref<8x128xf32, #tpu.memory_space<any>>) dst(%arg1 : memref<8x128xf32, #tpu.memory_space<any>>)
    return
  }
}

</mosaic_0001>

<llo_original>
// kernel: tpu_custom_call.1
$region0: #{tpu_custom_call.1}
  #allocation0 [shape = 'u32[]', space=smem, size = 0x4, offset = 0x4, fixed_abs, tag = 'smem constant byte address 0x4 - core index']
  #allocation1 [shape = 'u32[144,128]{1,0:T(1,128)}', space=vmem, size = 0x12000, scoped, tag = 'internal scratch']
  #allocation2 [shape = 's32[1]{0}', space=sflag, size = 0x4, scoped, tag = 'scratch operand']
  #allocation3 [shape = 's32[]', space=sflag, size = 0x4, offset = 0, fixed_abs, tag = 'sflag constant byte address 0x0 - dummy sync flag']
  #allocation4 [shape = 'u32[0]{0}', space=smem, size = 0, offset = 0, fixed_abs, tag = 'smem constant byte address 0x0 - null']
  %s0 = inlined_call_operand.hbm [shape: f32[4096,128], index: 0, kind: input, shape index: {}]
  %s1 = inlined_call_operand.hbm [shape: f32[8,128], index: 1, kind: output, shape index: {}]
  %s2 = sld [smem:[#allocation0]]
  $region2: #{tpu_custom_call.1} parent=0
    _
  %s4 = ssub.s32 1, %s2
  %s5 = scalar_select 0, %s4, %s2
  %s7 = sshll.u32 1, 14
  %s8 = sxor.u32 4294967295, %s7
  %s11 = sshll.u32 3, 24
  %s12 = sxor.u32 4294967295, %s11
  %s13 = sand.u32 0, %s12
  %s15 = sor.u32 %s13, 0
  %18 = dma.general %s0, 128, %s1, [#allocation2], [#allocation3], [#allocation4], %s15, 0
  %s19 = smul.u32 8, 1
  %s20 = sshll.u32 %s19, 4
  %21 = dma.done [#allocation2], %s20
  %22 = vsyncmov [#allocation2]
  %s23 = vpop.sfrf %22
  %p24 = scmp.eq.s32.totalorder %s23, 0
  %p25 = pneg %p24
  %27 = shalt.err (%p25)

</llo_original>
